<compile_context>
chip_gen: v5e
topology: v5e:2x2
jax: 0.10.0
libtpu: 0.0.40
codegen_flags: <defaults>
</compile_context>

<pallas_src>
import jax
import jax.numpy as jnp
from jax import lax
from jax.experimental import pallas as pl
from jax.experimental.pallas import tpu as pltpu

B = 8            # batch
P = 32           # pos_embedding output width (Fourier features)
PHALF = P // 2
H = 64           # location_encoder hidden width
E = 64           # mlp_input_len (location_encoder output width per month)
OUT = 8          # regression targets
N_MONTHS = 4     # months [3, 6, 9, 12]
LW = N_MONTHS * H            # slab lane width = 256 (2 lane-tiles, lane-dense)

# Single packed parameter slab `slab` row layout (lane width = LW = 256):
ROW_W23T = 0                 # rows [ 0,  8): w23^T = concat_m(w2 @ w3[m])^T  (OUT, 4H)
ROW_SCB = OUT                # row  [ 8    ): sincos@w1_sc + b1, month-major  (1, 4H)
ROW_B3 = OUT + 1             # row  [ 9    ): b3 + sum_m b2 @ w3[m], lanes [0, OUT)
ROW_FB = OUT + 2             # rows [10, 12): fourier_B * pi/180, lanes [0, P/2)
ROW_W1SIN = 16               # rows [16, 32): w1_loc[:P/2]  (sin part), lanes [0, H)
ROW_W1COS = 32               # rows [32, 48): w1_loc[P/2:]  (cos part), lanes [0, H)
SLAB_ROWS = 48               # multiple of 8 sublanes; all weight blocks 8-aligned


def probe_kernel(lonlat_ref, slab_ref, out_ref):
    # --- pos_embedding (fused): Fourier features of lon/lat.
    # TODO(synk): reference casts lonlat to float64 (.double()); TPU Pallas has
    # no f64 support, so the positional embedding is computed in float32.
    fbx = slab_ref[ROW_FB:ROW_FB + 1, 0:PHALF]              # (1, P/2), pre-scaled by pi/180
    fby = slab_ref[ROW_FB + 1:ROW_FB + 2, 0:PHALF]          # (1, P/2)
    proj = lonlat_ref[:, 0:1] * fbx + lonlat_ref[:, 1:2] * fby        # (B, P/2)
    sin_p = jnp.sin(proj)                                             # EUP
    cos_p = jnp.cos(proj)

    # --- location_encoder layer 1 ("loc" part of concat([loc, sin_m, cos_m]));
    #     shared across the 4 months.  w1 pre-split -> no (B, P) lane concat.
    w1s = slab_ref[ROW_W1SIN:ROW_W1SIN + PHALF, 0:H]                  # (P/2, H)
    w1c = slab_ref[ROW_W1COS:ROW_W1COS + PHALF, 0:H]                  # (P/2, H)
    h_base = (jnp.dot(sin_p, w1s, preferred_element_type=jnp.float32) +
              jnp.dot(cos_p, w1c, preferred_element_type=jnp.float32))  # (B, H)

    # --- per-month bias (month sin/cos @ W1_sc + b1, pre-folded, month-major
    #     along lanes) + ReLU: one lane replication + 1 add + 1 max.
    scb = slab_ref[ROW_SCB:ROW_SCB + 1, :]                            # (1, 4H)
    h_rep = jnp.concatenate([h_base, h_base, h_base, h_base], axis=-1)  # (B, 4H)
    relu_all = jnp.maximum(h_rep + scb, 0.0)                          # (B, 4H)

    # --- probe head: single K = 4H = 256 matmul against the pre-folded,
    #     lane-dense transposed weight (OUT, 4H); contract dim 1 vs 1.
    w23t = slab_ref[ROW_W23T:ROW_W23T + OUT, :]                       # (OUT, 4H)
    b3 = slab_ref[ROW_B3:ROW_B3 + 1, 0:OUT]                           # (1, OUT)
    acc = lax.dot_general(relu_all, w23t,
                          dimension_numbers=(((1,), (1,)), ((), ())),
                          preferred_element_type=jnp.float32)          # (B, OUT)
    out_ref[...] = acc + b3


def init_params(key):
    ks = jax.random.split(key, 8)

    def s(k, shape, scale):
        return jax.random.normal(k, shape, jnp.float32) * scale

    return dict(
        fourier_B=s(ks[0], (2, PHALF), 1.0),                       # pos_embedding freqs
        w1_loc=s(ks[1], (P, H), 1.0 / jnp.sqrt(P + 2.0)),          # W1[:P]  (loc part)
        w1_sc=s(ks[2], (2, H), 1.0 / jnp.sqrt(P + 2.0)),           # W1[P:]  (sin/cos part)
        b1=s(ks[3], (1, H), 0.01),
        w2=s(ks[4], (H, E), 1.0 / jnp.sqrt(float(H))),
        b2=s(ks[5], (1, E), 0.01),
        w3=s(ks[6], (N_MONTHS, E, OUT), 1.0 / jnp.sqrt(float(N_MONTHS * E))),
        b3=s(ks[7], (1, OUT), 0.01),
    )


def pack_params(params):
    """One-time offline fold of the frozen weights into ONE lane-dense slab."""
    months = jnp.array([3.0, 6.0, 9.0, 12.0], jnp.float32)
    sincos = jnp.stack([jnp.sin(months / 12.0 * 2.0 * jnp.pi),
                        jnp.cos(months / 12.0 * 2.0 * jnp.pi)], axis=-1)  # (4, 2)
    scb_flat = (sincos @ params["w1_sc"] + params["b1"]).reshape(1, LW)   # (1, 4H)
    fb_scaled = params["fourier_B"] * (jnp.pi / 180.0)                    # (2, P/2)

    # Fold frozen encoder layer 2 into the probe head: w23[m] = w2 @ w3[m].
    w23 = jnp.einsum("he,meo->mho", params["w2"], params["w3"])
    w23t = w23.reshape(N_MONTHS * H, OUT).T                               # (OUT, 4H)
    # b2 contribution becomes a constant folded into b3.
    b3_tot = params["b3"] + jnp.einsum("e,meo->o",
                                       params["b2"][0], params["w3"])[None, :]

    slab = jnp.zeros((SLAB_ROWS, LW), jnp.float32)
    slab = slab.at[ROW_W23T:ROW_W23T + OUT, :].set(w23t)
    slab = slab.at[ROW_SCB, :].set(scb_flat[0])
    slab = slab.at[ROW_B3, 0:OUT].set(b3_tot[0])
    slab = slab.at[ROW_FB, 0:PHALF].set(fb_scaled[0])
    slab = slab.at[ROW_FB + 1, 0:PHALF].set(fb_scaled[1])
    slab = slab.at[ROW_W1SIN:ROW_W1SIN + PHALF, 0:H].set(params["w1_loc"][:PHALF])
    slab = slab.at[ROW_W1COS:ROW_W1COS + PHALF, 0:H].set(params["w1_loc"][PHALF:])
    return slab


def probe_forward(lonlat, slab):
    vmem = pl.BlockSpec(memory_space=pltpu.MemorySpace.VMEM)
    flops = 2 * B * (2 * PHALF + 2 * PHALF * H + N_MONTHS * H * OUT)
    bytes_accessed = 4 * (lonlat.size + slab.size + B * OUT)
    return pl.pallas_call(
        probe_kernel,
        out_shape=jax.ShapeDtypeStruct((B, OUT), jnp.float32),
        in_specs=[vmem, vmem],
        out_specs=vmem,
        cost_estimate=pl.CostEstimate(flops=flops,
                                      transcendentals=B * P,
                                      bytes_accessed=bytes_accessed),
    )(lonlat.astype(jnp.float32), slab)


def probe_reference(lonlat, params):
    """Pure-JAX reference mirroring the PyTorch forward (use_months=True)."""
    proj = (lonlat * (jnp.pi / 180.0)) @ params["fourier_B"]
    loc = jnp.concatenate([jnp.sin(proj), jnp.cos(proj)], axis=-1)
    xs = []
    for m in [3.0, 6.0, 9.0, 12.0]:
        sc = jnp.array([jnp.sin(m / 12.0 * 2.0 * jnp.pi),
                        jnp.cos(m / 12.0 * 2.0 * jnp.pi)], jnp.float32)
        loc_month = jnp.concatenate(
            [loc, jnp.broadcast_to(sc, (loc.shape[0], 2))], axis=-1)      # (B, P+2)
        w1 = jnp.concatenate([params["w1_loc"], params["w1_sc"]], axis=0)  # (P+2, H)
        h = jnp.maximum(loc_month @ w1 + params["b1"], 0.0)
        xs.append(h @ params["w2"] + params["b2"])
    x = jnp.concatenate(xs, axis=-1)                                       # (B, 4E)
    w3 = params["w3"].reshape(N_MONTHS * E, OUT)
    return x @ w3 + params["b3"]


if __name__ == "__main__":
    key = jax.random.PRNGKey(0)
    k_in, k_par = jax.random.split(key)
    # lon/lat sample range
    lonlat = jax.random.uniform(k_in, (B, 2), jnp.float32,
                                minval=-90.0, maxval=90.0)
    params = init_params(k_par)
    slab = pack_params(params)   # offline fold of the frozen weights

    out = probe_forward(lonlat, slab)
    out = jax.block_until_ready(out)

    ref = probe_reference(lonlat, params)
    assert out.shape == (B, OUT) and out.dtype == jnp.float32
    assert jnp.allclose(out, ref, atol=1e-3, rtol=1e-3), float(
        jnp.max(jnp.abs(out - ref)))

    print("KERNEL_OK")
</pallas_src>

<mosaic_0001>
module attributes {stable_mosaic.version = 11 : i64} {
  func.func @probe_kernel(%arg0: memref<8x2xf32, #tpu.memory_space<vmem>>, %arg1: memref<48x256xf32, #tpu.memory_space<vmem>>, %arg2: memref<8x8xf32, #tpu.memory_space<vmem>>) attributes {dimension_semantics = [], scalar_prefetch = 0 : i64, scratch_operands = 0 : i64, tpu.core_type = #tpu.core_type<tc>} {
    %c10 = arith.constant 10 : index
    %c0 = arith.constant 0 : index
    %0 = vector.load %arg1[%c10, %c0] : memref<48x256xf32, #tpu.memory_space<vmem>>, vector<1x16xf32>
    %c11 = arith.constant 11 : index
    %c0_0 = arith.constant 0 : index
    %1 = vector.load %arg1[%c11, %c0_0] : memref<48x256xf32, #tpu.memory_space<vmem>>, vector<1x16xf32>
    %c0_1 = arith.constant 0 : index
    %c0_2 = arith.constant 0 : index
    %2 = vector.load %arg0[%c0_1, %c0_2] : memref<8x2xf32, #tpu.memory_space<vmem>>, vector<8x1xf32>
    %3 = vector.broadcast %2 : vector<8x1xf32> to vector<8x16xf32>
    %4 = vector.broadcast %0 : vector<1x16xf32> to vector<8x16xf32>
    %5 = arith.mulf %3, %4 : vector<8x16xf32>
    %c0_3 = arith.constant 0 : index
    %c1 = arith.constant 1 : index
    %6 = vector.load %arg0[%c0_3, %c1] : memref<8x2xf32, #tpu.memory_space<vmem>>, vector<8x1xf32>
    %7 = vector.broadcast %6 : vector<8x1xf32> to vector<8x16xf32>
    %8 = vector.broadcast %1 : vector<1x16xf32> to vector<8x16xf32>
    %9 = arith.mulf %7, %8 : vector<8x16xf32>
    %10 = arith.addf %5, %9 : vector<8x16xf32>
    %11 = math.sin %10 : vector<8x16xf32>
    %12 = math.cos %10 : vector<8x16xf32>
    %c16 = arith.constant 16 : index
    %c0_4 = arith.constant 0 : index
    %13 = vector.load %arg1[%c16, %c0_4] : memref<48x256xf32, #tpu.memory_space<vmem>>, vector<16x64xf32>
    %c32 = arith.constant 32 : index
    %c0_5 = arith.constant 0 : index
    %14 = vector.load %arg1[%c32, %c0_5] : memref<48x256xf32, #tpu.memory_space<vmem>>, vector<16x64xf32>
    %cst = arith.constant dense<0.000000e+00> : vector<8x64xf32>
    %15 = tpu.matmul %11, %13, %cst {dimension_numbers = #tpu.dot_dimension_numbers<[1], [0], [0], [1], [0, 0, 1, 1], [], []>} : vector<8x16xf32>, vector<16x64xf32>, vector<8x64xf32> -> vector<8x64xf32>
    %cst_6 = arith.constant dense<0.000000e+00> : vector<8x64xf32>
    %16 = tpu.matmul %12, %14, %cst_6 {dimension_numbers = #tpu.dot_dimension_numbers<[1], [0], [0], [1], [0, 0, 1, 1], [], []>} : vector<8x16xf32>, vector<16x64xf32>, vector<8x64xf32> -> vector<8x64xf32>
    %17 = arith.addf %15, %16 : vector<8x64xf32>
    %c8 = arith.constant 8 : index
    %c0_7 = arith.constant 0 : index
    %18 = vector.load %arg1[%c8, %c0_7] : memref<48x256xf32, #tpu.memory_space<vmem>>, vector<1x256xf32>
    %19 = tpu.concatenate %17, %17, %17, %17 in 1 : vector<8x64xf32>, vector<8x64xf32>, vector<8x64xf32>, vector<8x64xf32> -> vector<8x256xf32>
    %20 = vector.broadcast %18 : vector<1x256xf32> to vector<8x256xf32>
    %21 = arith.addf %19, %20 : vector<8x256xf32>
    %cst_8 = arith.constant 0.000000e+00 : f32
    %22 = vector.broadcast %cst_8 : f32 to vector<8x256xf32>
    %23 = arith.maximumf %21, %22 : vector<8x256xf32>
    %c0_9 = arith.constant 0 : index
    %c0_10 = arith.constant 0 : index
    %24 = vector.load %arg1[%c0_9, %c0_10] : memref<48x256xf32, #tpu.memory_space<vmem>>, vector<8x256xf32>
    %c9 = arith.constant 9 : index
    %c0_11 = arith.constant 0 : index
    %25 = vector.load %arg1[%c9, %c0_11] : memref<48x256xf32, #tpu.memory_space<vmem>>, vector<1x8xf32>
    %cst_12 = arith.constant dense<0.000000e+00> : vector<8x8xf32>
    %26 = tpu.matmul %23, %24, %cst_12 {dimension_numbers = #tpu.dot_dimension_numbers<[1], [1], [0], [0], [0, 0, 1, 0], [], []>} : vector<8x256xf32>, vector<8x256xf32>, vector<8x8xf32> -> vector<8x8xf32>
    %27 = vector.broadcast %25 : vector<1x8xf32> to vector<8x8xf32>
    %28 = arith.addf %26, %27 : vector<8x8xf32>
    %c0_13 = arith.constant 0 : index
    %c0_14 = arith.constant 0 : index
    %29 = vector.load %arg2[%c0_13, %c0_14] : memref<8x8xf32, #tpu.memory_space<vmem>>, vector<8x8xf32>
    tpu.vector_store %arg2[%c0_13, %c0_14], %28 {strides = array<i32>} : memref<8x8xf32, #tpu.memory_space<vmem>>, vector<8x8xf32>,
    return
  }
}

</mosaic_0001>

<llo_original>
// kernel: tpu_custom_call.1
$region0: #{tpu_custom_call.1}
  #allocation0 [shape = 'u32[]', space=smem, size = 0x4, offset = 0x4, fixed_abs, tag = 'smem constant byte address 0x4 - core index']
  #allocation1 [shape = 'u32[72,128]{1,0:T(1,128)}', space=vmem, size = 0x9000, scoped, tag = 'internal scratch']
  %s0 = inlined_call_operand.vmem [shape: f32[8,2], index: 0, kind: input, shape index: {}]
  %s1 = inlined_call_operand.hbm [shape: f32[48,256], index: 1, kind: input, shape index: {}]
  %s2 = inlined_call_operand.hbm [shape: f32[8,8], index: 2, kind: output, shape index: {}]
  %s3 = sld [smem:[#allocation0]]
  $region22: #{tpu_custom_call.1} parent=0
    _
  %s5 = ssub.s32 1, %s3
  %s6 = scalar_select 0, %s5, %s3
  $region1: #{tpu_custom_call.1} parent=0
    #allocation2 [shape = 'u8[49152]{0}', space=vmem, size = 0xc000, scoped, tag = 'input window, operand 1, single buffered']
    #allocation3 [shape = 's32[1]{0}', space=sflag, size = 0x4, scoped, tag = 'scoped memory for tpu_custom_call.1']
    #allocation4 [shape = 's32[1]{0}', space=sflag, size = 0x4, scoped, tag = 'scoped memory for tpu_custom_call.1']
    #allocation5 [shape = 'u8[4096]{0}', space=vmem, size = 0x1000, scoped, tag = 'output window, operand 0, single buffered']
    %7 = vsyncpa [#allocation3], 0
    %8 = vsyncpa [#allocation4], 0
    // Predicated region
    $region2: #{tpu_custom_call.1} parent=1 // pred_check
      _
    $region3: #{tpu_custom_call.1} parent=1 // pred_check_branch
      %10 = sbr.rel (0) target = $region5
    $region4: #{tpu_custom_call.1} parent=1 // pred_region
      _
    $region5: #{tpu_custom_call.1} parent=1 // pred_fallthru
      _
    // Predicated region
    $region6: #{tpu_custom_call.1} parent=1 // pred_check
      _
    $region7: #{tpu_custom_call.1} parent=1 // pred_check_branch
      %12 = sbr.rel (0) target = $region9
    $region8: #{tpu_custom_call.1} parent=1 // pred_region
      %14 = vsyncadd [#allocation3], 0
      %s15 = sshll.u32 %s1, 4
      %s16 = int_to_ptr.hbm [resolvable:$true] %s15
      %s17 = sshll.u32 [#allocation2], 4
      %s18 = int_to_ptr.vmem [resolvable:$true] %s17
      %23 = dma.hbm_to_vmem [thread:$0]  %s16, 1536, %s18, [#allocation3], 256, 256, 16
    $region9: #{tpu_custom_call.1} parent=1 // pred_fallthru
      _
    // Predicated region
    $region10: #{tpu_custom_call.1} parent=1 // pred_check
      _
    $region11: #{tpu_custom_call.1} parent=1 // pred_check_branch
      %25 = sbr.rel (0) target = $region13
    $region12: #{tpu_custom_call.1} parent=1 // pred_region
      %27 = dma.done [#allocation3], 1536
    $region13: #{tpu_custom_call.1} parent=1 // pred_fallthru
      _
    %v28 = vld [vmem:[#allocation2 + $0x12] ss:$0 sm:$0xff]
    %v29 = vld [vmem:[#allocation2 + $0x13] ss:$0 sm:$0xff]
    %v30 = vld [vmem:[%s0] sm:$0xff]
    %32 = vset.pattern.permute.xlu0 0
    %33 = vperm.xlu0 %32, %v30
    %v34 = vpop.permute.xlu0 %33
    %v36 = vmul.f32 %v34, %v28
    %37 = vset.pattern.permute.xlu0 1
    %38 = vperm.xlu0 %37, %v30
    %v39 = vpop.permute.xlu0 %38
    %v41 = vmul.f32 %v39, %v29
    %v42 = vadd.f32 %v36, %v41
    %v43 = vand.u32 2147483647, %v42
    %vm44 = vcmp.le.f32.partialorder %v43, 0.7853982
    %vm45 = vcmp.lt.s32.totalorder %v42, 0
    %v46 = vand.u32 %v42, 2139095040
    %v47 = vshrl.u32 %v46, 23
    %v48 = vsub.s32 %v47, 127
    %v49 = vand.u32 2147483647, %v42
    %v50 = vand.u32 %v49, 8388607
    %v51 = vor.u32 %v50, 8388608
    %v52 = vsub.s32 0, %v51
    %v53 = vadd.s32 %v48, 1
    %vm54 = vcmp.gt.s32.totalorder %v53, 0
    %v55 = vsel %vm54, %v53, 0
    %v56 = vshrl.u32 %v55, 5
    %v57 = vand.u32 %v55, 31
    %v58 = vsub.s32 32, %v57
    %v59 = vshrl.u32 683565275, %v58
    %v60 = vshll.u32 683565275, %v57
    %v61 = vshrl.u32 2475754826, %v58
    %v62 = vor.u32 %v60, %v61
    %v63 = vshll.u32 2475754826, %v57
    %v64 = vshrl.u32 2131351028, %v58
    %v65 = vor.u32 %v63, %v64
    %v66 = vshll.u32 2131351028, %v57
    %v67 = vshrl.u32 2102212464, %v58
    %v68 = vor.u32 %v66, %v67
    %v69 = vshll.u32 2102212464, %v57
    %v70 = vshrl.u32 920167782, %v58
    %v71 = vor.u32 %v69, %v70
    %v72 = vshll.u32 920167782, %v57
    %v73 = vshrl.u32 1326507024, %v58
    %v74 = vor.u32 %v72, %v73
    %vm75 = vcmp.lt.s32.totalorder %v56, 1
    %vm76 = vcmp.lt.s32.totalorder %v56, 2
    %vm77 = vcmp.lt.s32.totalorder %v56, 3
    %vm78 = vcmp.lt.s32.totalorder %v56, 4
    %v79 = vsel %vm75, %v59, %v62
    %v80 = vsel %vm78, %v68, 2102212464
    %v81 = vsel %vm77, %v65, %v80
    %v82 = vsel %vm76, %v79, %v81
    %v83 = vsel %vm75, %v62, %v65
    %v84 = vsel %vm78, %v71, 920167782
    %v85 = vsel %vm77, %v68, %v84
    %v86 = vsel %vm76, %v83, %v85
    %v87 = vsel %vm75, %v65, %v68
    %v88 = vsel %vm78, %v74, 1326507024
    %v89 = vsel %vm77, %v71, %v88
    %v90 = vsel %vm76, %v87, %v89
    %v91 = vshll.u32 %v51, 8
    %v92 = vand.u32 %v91, 65535
    %v93 = vshrl.u32 %v91, 16
    %v94 = vand.u32 %v90, 65535
    %v95 = vshrl.u32 %v90, 16
    %v96 = vmul.u32 %v92, %v94
    %v97 = vmul.u32 %v92, %v95
    %v98 = vmul.u32 %v93, %v94
    %v99 = vmul.u32 %v93, %v95
    %v100 = vshll.u32 %v97, 16
    %v101 = vshrl.u32 %v97, 16
    %v102 = vshll.u32 %v98, 16
    %v103 = vshrl.u32 %v98, 16
    %vm104 = vc.u32 %v96, %v100
    %v105 = vsel %vm104, 1, 0
    %v106 = vadd.s32 %v96, %v100
    %v107 = vadd.s32 %v99, %v105
    %vm108 = vc.u32 %v106, %v102
    %v109 = vsel %vm108, 1, 0
    %v110 = vadd.s32 %v106, %v102
    %v111 = vadd.s32 %v107, %v109
    %v112 = vadd.s32 %v111, %v101
    %v113 = vadd.s32 %v112, %v103
    %v114 = vand.u32 %v91, 65535
    %v115 = vshrl.u32 %v91, 16
    %v116 = vand.u32 %v86, 65535
    %v117 = vshrl.u32 %v86, 16
    %v118 = vmul.u32 %v114, %v116
    %v119 = vmul.u32 %v114, %v117
    %v120 = vmul.u32 %v115, %v116
    %v121 = vmul.u32 %v115, %v117
    %v122 = vshll.u32 %v119, 16
    %v123 = vshrl.u32 %v119, 16
    %v124 = vshll.u32 %v120, 16
    %v125 = vshrl.u32 %v120, 16
    %vm126 = vc.u32 %v118, %v122
    %v127 = vsel %vm126, 1, 0
    %v128 = vadd.s32 %v118, %v122
    %v129 = vadd.s32 %v121, %v127
    %vm130 = vc.u32 %v128, %v124
    %v131 = vsel %vm130, 1, 0
    %v132 = vadd.s32 %v128, %v124
    %v133 = vadd.s32 %v129, %v131
    %v134 = vadd.s32 %v133, %v123
    %v135 = vadd.s32 %v134, %v125
    %v136 = vmul.u32 %v91, %v82
    %v137 = vadd.s32 %v113, %v132
    %vm138 = vc.u32 %v113, %v132
    %v139 = vadd.s32 %v135, 1
    %v140 = vsel %vm138, %v139, %v135
    %v141 = vadd.s32 %v136, %v140
    %v142 = vadd.s32 %v141, 536870912
    %v143 = vshrl.u32 %v142, 30
    %v144 = vshll.u32 %v143, 30
    %v145 = vsub.s32 %v141, %v144
    %vm146 = vcmp.lt.s32.totalorder %v145, 0
    %v147 = vsub.s32 0, %v145
    %v148 = vsel %vm146, %v147, %v145
    %v149 = vclz %v148
    %v150 = vsub.s32 %v149, 2
    %vm151 = vcmp.gt.s32.totalorder 0, %v150
    %v152 = vsel %vm151, 0, %v150
    %v153 = vsub.s32 32, %v152
    %v154 = vshll.u32 %v145, %v152
    %v155 = vshrl.u32 %v137, %v153
    %v156 = vor.u32 %v154, %v155
    %v157 = vsub.s32 4294967266, %v152
    %v158 = vadd.s32 %v157, 127
    %v159 = vshll.u32 %v158, 23
    %v160 = vor.u32 4788187, %v159
    %v161 = vand.u32 2147483647, %v160
    %v163 = vcvt.s32.f32 %v156
    %v164 = vmul.f32 %v163, %v161
    %v165 = vxor.u32 %v164, 2147483648
    %v166 = vsel %vm45, %v165, %v164
    %v167 = vsub.s32 4, %v143
    %v168 = vsel %vm45, %v167, %v143
    %v169 = vsel %vm44, %v42, %v166
    %v170 = vsel %vm44, 0, %v168
    %v171 = vmul.f32 %v169, %v169
    %v172 = vmul.f32 %v171, -0.001358992
    %v173 = vadd.f32 %v172, 0.041655596
    %v174 = vmul.f32 %v171, %v173
    %v175 = vadd.f32 %v174, -0.4999988
    %v176 = vmul.f32 %v171, %v175
    %v177 = vadd.f32 1.0, %v176
    %v178 = vmul.f32 %v169, %v169
    %v179 = vmul.f32 %v178, -0.00019511016
    %v180 = vadd.f32 %v179, 0.008332121
    %v181 = vmul.f32 %v178, %v180
    %v182 = vadd.f32 %v181, -0.16666654
    %v183 = vmul.f32 %v178, %v182
    %v184 = vadd.f32 %v183, 1.0
    %v185 = vmul.f32 %v184, %v169
    %vm186 = vweird.f32 %v42
    %v187 = vadd.s32 %v170, 3
    %v188 = vand.u32 %v187, 3
    %vm189 = vcmp.lt.s32.totalorder %v188, 2
    %vm190 = vcmp.eq.s32.totalorder %v188, 0
    %v191 = vxor.u32 %v185, 2147483648
    %v192 = vsel %vm190, %v177, %v191
    %vm193 = vcmp.eq.s32.totalorder %v188, 2
    %v194 = vxor.u32 %v177, 2147483648
    %v195 = vsel %vm193, %v194, %v185
    %v196 = vsel %vm189, %v192, %v195
    %v197 = vsel %vm186, nan, %v196
    %v198 = vand.u32 2147483647, %v42
    %vm199 = vcmp.le.f32.partialorder %v198, 0.7853982
    %vm200 = vcmp.lt.s32.totalorder %v42, 0
    %v201 = vand.u32 %v42, 2139095040
    %v202 = vshrl.u32 %v201, 23
    %v203 = vsub.s32 %v202, 127
    %v204 = vand.u32 2147483647, %v42
    %v205 = vand.u32 %v204, 8388607
    %v206 = vor.u32 %v205, 8388608
    %v207 = vsub.s32 0, %v206
    %v208 = vadd.s32 %v203, 1
    %vm209 = vcmp.gt.s32.totalorder %v208, 0
    %v210 = vsel %vm209, %v208, 0
    %v211 = vshrl.u32 %v210, 5
    %v212 = vand.u32 %v210, 31
    %v213 = vsub.s32 32, %v212
    %v214 = vshrl.u32 683565275, %v213
    %v215 = vshll.u32 683565275, %v212
    %v216 = vshrl.u32 2475754826, %v213
    %v217 = vor.u32 %v215, %v216
    %v218 = vshll.u32 2475754826, %v212
    %v219 = vshrl.u32 2131351028, %v213
    %v220 = vor.u32 %v218, %v219
    %v221 = vshll.u32 2131351028, %v212
    %v222 = vshrl.u32 2102212464, %v213
    %v223 = vor.u32 %v221, %v222
    %v224 = vshll.u32 2102212464, %v212
    %v225 = vshrl.u32 920167782, %v213
    %v226 = vor.u32 %v224, %v225
    %v227 = vshll.u32 920167782, %v212
    %v228 = vshrl.u32 1326507024, %v213
    %v229 = vor.u32 %v227, %v228
    %vm230 = vcmp.lt.s32.totalorder %v211, 1
    %vm231 = vcmp.lt.s32.totalorder %v211, 2
    %vm232 = vcmp.lt.s32.totalorder %v211, 3
    %vm233 = vcmp.lt.s32.totalorder %v211, 4
    %v234 = vsel %vm230, %v214, %v217
    %v235 = vsel %vm233, %v223, 2102212464
    %v236 = vsel %vm232, %v220, %v235
    %v237 = vsel %vm231, %v234, %v236
    %v238 = vsel %vm230, %v217, %v220
    %v239 = vsel %vm233, %v226, 920167782
    %v240 = vsel %vm232, %v223, %v239
    %v241 = vsel %vm231, %v238, %v240
    %v242 = vsel %vm230, %v220, %v223
    %v243 = vsel %vm233, %v229, 1326507024
    %v244 = vsel %vm232, %v226, %v243
    %v245 = vsel %vm231, %v242, %v244
    %v246 = vshll.u32 %v206, 8
    %v247 = vand.u32 %v246, 65535
    %v248 = vshrl.u32 %v246, 16
    %v249 = vand.u32 %v245, 65535
    %v250 = vshrl.u32 %v245, 16
    %v251 = vmul.u32 %v247, %v249
    %v252 = vmul.u32 %v247, %v250
    %v253 = vmul.u32 %v248, %v249
    %v254 = vmul.u32 %v248, %v250
    %v255 = vshll.u32 %v252, 16
    %v256 = vshrl.u32 %v252, 16
    %v257 = vshll.u32 %v253, 16
    %v258 = vshrl.u32 %v253, 16
    %vm259 = vc.u32 %v251, %v255
    %v260 = vsel %vm259, 1, 0
    %v261 = vadd.s32 %v251, %v255
    %v262 = vadd.s32 %v254, %v260
    %vm263 = vc.u32 %v261, %v257
    %v264 = vsel %vm263, 1, 0
    %v265 = vadd.s32 %v261, %v257
    %v266 = vadd.s32 %v262, %v264
    %v267 = vadd.s32 %v266, %v256
    %v268 = vadd.s32 %v267, %v258
    %v269 = vand.u32 %v246, 65535
    %v270 = vshrl.u32 %v246, 16
    %v271 = vand.u32 %v241, 65535
    %v272 = vshrl.u32 %v241, 16
    %v273 = vmul.u32 %v269, %v271
    %v274 = vmul.u32 %v269, %v272
    %v275 = vmul.u32 %v270, %v271
    %v276 = vmul.u32 %v270, %v272
    %v277 = vshll.u32 %v274, 16
    %v278 = vshrl.u32 %v274, 16
    %v279 = vshll.u32 %v275, 16
    %v280 = vshrl.u32 %v275, 16
    %vm281 = vc.u32 %v273, %v277
    %v282 = vsel %vm281, 1, 0
    %v283 = vadd.s32 %v273, %v277
    %v284 = vadd.s32 %v276, %v282
    %vm285 = vc.u32 %v283, %v279
    %v286 = vsel %vm285, 1, 0
    %v287 = vadd.s32 %v283, %v279
    %v288 = vadd.s32 %v284, %v286
    %v289 = vadd.s32 %v288, %v278
    %v290 = vadd.s32 %v289, %v280
    %v291 = vmul.u32 %v246, %v237
    %v292 = vadd.s32 %v268, %v287
    %vm293 = vc.u32 %v268, %v287
    %v294 = vadd.s32 %v290, 1
    %v295 = vsel %vm293, %v294, %v290
    %v296 = vadd.s32 %v291, %v295
    %v297 = vadd.s32 %v296, 536870912
    %v298 = vshrl.u32 %v297, 30
    %v299 = vshll.u32 %v298, 30
    %v300 = vsub.s32 %v296, %v299
    %vm301 = vcmp.lt.s32.totalorder %v300, 0
    %v302 = vsub.s32 0, %v300
    %v303 = vsel %vm301, %v302, %v300
    %v304 = vclz %v303
    %v305 = vsub.s32 %v304, 2
    %vm306 = vcmp.gt.s32.totalorder 0, %v305
    %v307 = vsel %vm306, 0, %v305
    %v308 = vsub.s32 32, %v307
    %v309 = vshll.u32 %v300, %v307
    %v310 = vshrl.u32 %v292, %v308
    %v311 = vor.u32 %v309, %v310
    %v312 = vsub.s32 4294967266, %v307
    %v313 = vadd.s32 %v312, 127
    %v314 = vshll.u32 %v313, 23
    %v315 = vor.u32 4788187, %v314
    %v316 = vand.u32 2147483647, %v315
    %v318 = vcvt.s32.f32 %v311
    %v319 = vmul.f32 %v318, %v316
    %v320 = vxor.u32 %v319, 2147483648
    %v321 = vsel %vm200, %v320, %v319
    %v322 = vsub.s32 4, %v298
    %v323 = vsel %vm200, %v322, %v298
    %v324 = vsel %vm199, %v42, %v321
    %v325 = vsel %vm199, 0, %v323
    %v326 = vmul.f32 %v324, %v324
    %v327 = vmul.f32 %v326, -0.001358992
    %v328 = vadd.f32 %v327, 0.041655596
    %v329 = vmul.f32 %v326, %v328
    %v330 = vadd.f32 %v329, -0.4999988
    %v331 = vmul.f32 %v326, %v330
    %v332 = vadd.f32 1.0, %v331
    %v333 = vmul.f32 %v324, %v324
    %v334 = vmul.f32 %v333, -0.00019511016
    %v335 = vadd.f32 %v334, 0.008332121
    %v336 = vmul.f32 %v333, %v335
    %v337 = vadd.f32 %v336, -0.16666654
    %v338 = vmul.f32 %v333, %v337
    %v339 = vadd.f32 %v338, 1.0
    %v340 = vmul.f32 %v339, %v324
    %vm341 = vweird.f32 %v42
    %v342 = vand.u32 %v325, 3
    %vm343 = vcmp.lt.s32.totalorder %v342, 2
    %vm344 = vcmp.eq.s32.totalorder %v342, 0
    %v345 = vxor.u32 %v340, 2147483648
    %v346 = vsel %vm344, %v332, %v345
    %vm347 = vcmp.eq.s32.totalorder %v342, 2
    %v348 = vxor.u32 %v332, 2147483648
    %v349 = vsel %vm347, %v348, %v340
    %v350 = vsel %vm343, %v346, %v349
    %v351 = vsel %vm341, nan, %v350
    %v352 = vld [vmem:[#allocation2 + $0x20] sm:$0xff]
    %v353 = vld [vmem:[#allocation2 + $0x30] sm:$0xff]
    %v354 = vld [vmem:[#allocation2 + $0x40] sm:$0xff]
    %v355 = vld [vmem:[#allocation2 + $0x50] sm:$0xff]
    %vm356 = vcmask 130048
    %v358 = vsel %vm356, %v351, 0
    %360 = vmatpush.msra.mxu0 0.0
    %361 = vmatpush.msra.mxu0 0.0
    %362 = vmatpush.msra.mxu0 0.0
    %363 = vmatpush.msra.mxu0 0.0
    %364 = vmatpush.msra.mxu0 0.0
    %365 = vmatpush.msra.mxu0 0.0
    %366 = vmatpush.msra.mxu0 0.0
    %367 = vmatpush.msra.mxu0 0.0
    %368 = vmatpush.msra.mxu0 0.0
    %369 = vmatpush.msra.mxu0 0.0
    %370 = vmatpush.msra.mxu0 0.0
    %371 = vmatpush.msra.mxu0 0.0
    %372 = vmatpush.msra.mxu0 0.0
    %373 = vmatpush.msra.mxu0 0.0
    %374 = vmatpush.msra.mxu0 %v355
    %375 = vmatpush.msra.mxu0 %v354
    %376 = vmatmul.f32.gmra.mxu0 %v358
    %v377 = vpop.f32.mrf.mxu0
    %v378 = vadd.f32 0.0, %v377
    %379 = vdwg.mxu0
    %v381 = vsel %vm356, %v197, 0
    %383 = vmatpush.msra.mxu0 0.0
    %384 = vmatpush.msra.mxu0 0.0
    %385 = vmatpush.msra.mxu0 0.0
    %386 = vmatpush.msra.mxu0 0.0
    %387 = vmatpush.msra.mxu0 0.0
    %388 = vmatpush.msra.mxu0 0.0
    %389 = vmatpush.msra.mxu0 0.0
    %390 = vmatpush.msra.mxu0 0.0
    %391 = vmatpush.msra.mxu0 0.0
    %392 = vmatpush.msra.mxu0 0.0
    %393 = vmatpush.msra.mxu0 0.0
    %394 = vmatpush.msra.mxu0 0.0
    %395 = vmatpush.msra.mxu0 0.0
    %396 = vmatpush.msra.mxu0 0.0
    %397 = vmatpush.msra.mxu0 %v353
    %398 = vmatpush.msra.mxu0 %v352
    %399 = vmatmul.f32.gmra.mxu0 %v381
    %v400 = vpop.f32.mrf.mxu0
    %v401 = vadd.f32 %v378, %v400
    %402 = vdwg.mxu0
    %s403 = scalar_lea.vmem [#allocation2], 16
    %v404 = vld [vmem:[%s403] ss:$8 sm:$0x3]
    %406 = vrot.lane.b32.xlu0 %v401, 64
    %v407 = vpop.permute.xlu0 %406
    %vm409 = vcmask 523264
    %v410 = vsel %vm409, %v401, %v407
    %v412 = vperm.slane %v404, 0
    %v413 = vperm.slane %v404, 1
    %v416 = vadd.f32 %v410, %v412
    %v417 = vadd.f32 %v410, %v413
    %v418 = vmax.f32 %v416, 0.0
    %v419 = vmax.f32 %v417, 0.0
    %v420 = vld [vmem:[#allocation2] sm:$0xff]
    %v421 = vld [vmem:[#allocation2 + $0x8] sm:$0xff]
    %v422 = vld [vmem:[#allocation2 + $0x11] ss:$0 sm:$0xff]
    %423 = vmatpush.xpose.msra.mxu0 0.0
    %424 = vmatpush.xpose.msra.mxu0 0.0
    %425 = vmatpush.xpose.msra.mxu0 0.0
    %426 = vmatpush.xpose.msra.mxu0 0.0
    %427 = vmatpush.xpose.msra.mxu0 0.0
    %428 = vmatpush.xpose.msra.mxu0 0.0
    %429 = vmatpush.xpose.msra.mxu0 0.0
    %430 = vmatpush.xpose.msra.mxu0 0.0
    %431 = vmatpush.xpose.msra.mxu0 0.0
    %432 = vmatpush.xpose.msra.mxu0 0.0
    %433 = vmatpush.xpose.msra.mxu0 0.0
    %434 = vmatpush.xpose.msra.mxu0 0.0
    %435 = vmatpush.xpose.msra.mxu0 0.0
    %436 = vmatpush.xpose.msra.mxu0 0.0
    %437 = vmatpush.xpose.msra.mxu0 0.0
    %438 = vmatpush.xpose.msra.mxu0 %v420
    %439 = vmatmul.f32.gmra.mxu0 %v418
    %v440 = vpop.f32.mrf.mxu0
    %v441 = vadd.f32 %v422, %v440
    %442 = vdwg.mxu0
    %443 = vmatpush.xpose.msra.mxu0 0.0
    %444 = vmatpush.xpose.msra.mxu0 0.0
    %445 = vmatpush.xpose.msra.mxu0 0.0
    %446 = vmatpush.xpose.msra.mxu0 0.0
    %447 = vmatpush.xpose.msra.mxu0 0.0
    %448 = vmatpush.xpose.msra.mxu0 0.0
    %449 = vmatpush.xpose.msra.mxu0 0.0
    %450 = vmatpush.xpose.msra.mxu0 0.0
    %451 = vmatpush.xpose.msra.mxu0 0.0
    %452 = vmatpush.xpose.msra.mxu0 0.0
    %453 = vmatpush.xpose.msra.mxu0 0.0
    %454 = vmatpush.xpose.msra.mxu0 0.0
    %455 = vmatpush.xpose.msra.mxu0 0.0
    %456 = vmatpush.xpose.msra.mxu0 0.0
    %457 = vmatpush.xpose.msra.mxu0 0.0
    %458 = vmatpush.xpose.msra.mxu0 %v421
    %459 = vmatmul.f32.gmra.mxu0 %v419
    %v460 = vpop.f32.mrf.mxu0
    %v461 = vadd.f32 %v441, %v460
    %462 = vdwg.mxu0
    %vm463 = vcmask 64512
    %464 = vst.msk [vmem:[#allocation5] sm:$0xff] %vm463, %v461
    // Predicated region
    $region14: #{tpu_custom_call.1} parent=1 // pred_check
      _
    $region15: #{tpu_custom_call.1} parent=1 // pred_check_branch
      %466 = sbr.rel (0) target = $region17
    $region16: #{tpu_custom_call.1} parent=1 // pred_region
      %468 = vsyncadd [#allocation4], 0
      %s470 = sshll.u32 [#allocation5], 4
      %s471 = int_to_ptr.vmem [resolvable:$true] %s470
      %s472 = sshll.u32 %s2, 4
      %s473 = int_to_ptr.hbm [resolvable:$true] %s472
      %475 = dma.vmem_to_hbm [thread:$0]  %s471, 128, %s473, [#allocation4]
    $region17: #{tpu_custom_call.1} parent=1 // pred_fallthru
      _
    // Predicated region
    $region18: #{tpu_custom_call.1} parent=1 // pred_check
      _
    $region19: #{tpu_custom_call.1} parent=1 // pred_check_branch
      %477 = sbr.rel (0) target = $region21
    $region20: #{tpu_custom_call.1} parent=1 // pred_region
      %479 = dma.done [#allocation4], 128
    $region21: #{tpu_custom_call.1} parent=1 // pred_fallthru
      _
    %480 = vsyncpa [#allocation3], 1
    %481 = vsyncpa [#allocation4], 1

</llo_original>
